<compile_context>
chip_gen: v6e
topology: v6e:2x2x1
jax: 0.10.0
libtpu: 0.0.40
codegen_flags: <defaults>
</compile_context>

<pallas_src>
import numpy as np
import jax
import jax.numpy as jnp
from jax.experimental import pallas as pl
from jax.experimental.pallas import tpu as pltpu

# ---------------- problem sizes (small, consistent with the module) ----------
B = 2            # batch
N = 8            # number of label nodes
D_VIS = 16       # visual_feature_dim
D_LAB = 16       # gcn_label_feature_dim
D_IN = D_LAB + D_VIS
F_OUT = 8        # gat_out_per_head_dim
N_HEADS = 4      # n_gat_heads
D_CAT = N_HEADS * F_OUT     # 32 (concat_heads=True)
E_DIM = 16       # final_embedding_dim
ALPHA = 0.2      # LeakyReLU slope in GAT
NEG_INF = -9e15  # standard pyGAT masking constant

BN = B * N                  # 16  -> (image, node) rows
HBN = N_HEADS * BN          # 64  -> (head, image, node) rows

# ---------------- packed parameter-slab layout (SLAB_ROWS x 128, f32) --------
SLAB_COLS = 128
R_W = 0          # rows   0:32 : w_cat [:,0:32] | a_fused [:,32:40] | w_final [:,40:56]
R_BIG = 32       # rows  32:96 : adj_bd [:,0:16] | head_sel [:,16:20]
R_LAB = 96       # rows 96:104 : labels_features [:,0:16]
R_GSEL = 104     # rows 104:106: per-image node selector [:,0:16]
R_HMASK = 112    # rows 112:116: head column mask [:,0:32]
R_Q = 120        # row  120    : attention-pooling query [0:32]
R_BIAS = 128     # row  128    : final fc bias [0:16]
SLAB_ROWS = 136
C_A = D_CAT                      # 32 : lane offset of a_fused
C_WF = D_CAT + 2 * N_HEADS       # 40 : lane offset of w_final


def fgsbir_gat_kernel(vis_ref, slab_ref, out_ref):
    f32 = jnp.float32

    # ---- static views into the single lane-dense parameter slab ------------
    w_lab_cat = slab_ref[R_W:R_W + D_LAB, 0:D_CAT]                # (16, 32)
    w_vis_cat = slab_ref[R_W + D_LAB:R_W + D_IN, 0:D_CAT]         # (16, 32)
    a_fused = slab_ref[R_W:R_W + D_CAT, C_A:C_A + 2 * N_HEADS]    # (32, 8)
    wf = slab_ref[R_W:R_W + D_CAT, C_WF:C_WF + E_DIM]             # (32, 16)
    adj_bd = slab_ref[R_BIG:R_BIG + HBN, 0:BN]                    # (64, 16)
    head_sel = slab_ref[R_BIG:R_BIG + HBN, BN:BN + N_HEADS]       # (64, 4)
    lab = slab_ref[R_LAB:R_LAB + N, 0:D_LAB]                      # (8, 16)
    gsel = slab_ref[R_GSEL:R_GSEL + B, 0:BN]                      # (2, 16)
    headmask = slab_ref[R_HMASK:R_HMASK + N_HEADS, 0:D_CAT]       # (4, 32)
    q_row = slab_ref[R_Q:R_Q + 1, 0:D_CAT]                        # (1, 32)
    b_fin = slab_ref[R_BIAS:R_BIAS + 1, 0:E_DIM]                  # (1, 16)

    vis = vis_ref[...]                                            # (2, 16)

    # ---- Wh for all heads and BOTH images (heads fused on lanes) -----------
    wh_lab = jnp.dot(lab, w_lab_cat, preferred_element_type=f32)  # (8, 32)  image-independent
    vis_t = jnp.dot(vis, w_vis_cat, preferred_element_type=f32)   # (2, 32)  both images at once
    wh = jnp.concatenate([wh_lab + vis_t[0:1, :],
                          wh_lab + vis_t[1:2, :]], axis=0)        # (16, 32)

    # ---- attention logits for all heads: single fused contraction ----------
    ee = jnp.dot(wh, a_fused, preferred_element_type=f32)         # (16, 8) = [e_src | e_dst]
    ee_src = ee[:, 0:N_HEADS]                                     # (16, 4)
    ee_dst = ee[:, N_HEADS:2 * N_HEADS]                           # (16, 4)

    # source logits as a column on the (head, image, node) stacked row axis
    src64 = jnp.tile(ee_src, (N_HEADS, 1))                        # (64, 4)
    e_src = jnp.sum(src64 * head_sel, axis=-1, keepdims=True)     # (64, 1)
    # destination logits laid out as rows: head_sel @ ee_dst^T (tiny contraction)
    e_dst = jnp.einsum('rh,mh->rm', head_sel, ee_dst,
                       preferred_element_type=f32)                # (64, 16)

    e = e_src + e_dst                                             # (64, 16)
    e = jnp.where(e > 0, e, ALPHA * e)                            # LeakyReLU
    e = jnp.where(adj_bd > 0, e, NEG_INF)                         # block-diag adjacency mask

    # ---- softmax over neighbours, one pass over heads x images -------------
    e = e - jnp.max(e, axis=-1, keepdims=True)
    p = jnp.exp(e)
    attn = p / jnp.sum(p, axis=-1, keepdims=True)                 # (64, 16)

    # ---- neighbour aggregation for all heads/images: one matmul ------------
    h_full = jnp.dot(attn, wh, preferred_element_type=f32)        # (64, 32)
    h_cat = jnp.zeros((BN, D_CAT), f32)
    for h in range(N_HEADS):                                      # head-concat selection
        h_cat = h_cat + h_full[h * BN:(h + 1) * BN, :] * headmask[h:h + 1, :]

    # ELU (concat_heads=True); clamp exp arg of the discarded branch
    h_act = jnp.where(h_cat > 0, h_cat,
                      jnp.exp(jnp.minimum(h_cat, 0.0)) - 1.0)     # (16, 32)

    # ---- attention pooling over nodes, batched over both images ------------
    scores = jnp.sum(h_act * q_row, axis=-1, keepdims=True)       # (16, 1)
    scores = scores - jnp.max(scores, axis=0, keepdims=True)      # shared shift cancels per image
    sp = jnp.exp(scores)                                          # (16, 1)
    pooled_un = jnp.dot(gsel, h_act * sp, preferred_element_type=f32)  # (2, 32)
    denom = jnp.dot(gsel, sp, preferred_element_type=f32)              # (2, 1)
    pooled = pooled_un / denom                                         # (2, 32)

    # ---- final fc for both images + single full-block store ----------------
    out = jnp.dot(pooled, wf, preferred_element_type=f32) + b_fin      # (2, 16)
    out_ref[...] = out.astype(out_ref.dtype)


def pack_params(labels_features, adj, w_lab, w_vis, a_src, a_dst, q,
                w_final, b_final):
    """One-time, host-side (numpy) packing of every static tensor into a single
    lane-dense (SLAB_ROWS, 128) f32 slab.  Runs at parameter-setup time, NOT
    inside the per-call jitted forward."""
    lab = np.asarray(labels_features, np.float32)                 # (N, D_LAB)
    adj = np.asarray(adj, np.float32)                             # (N, N)
    w_lab = np.asarray(w_lab, np.float32)                         # (H, D_LAB, F_OUT)
    w_vis = np.asarray(w_vis, np.float32)                         # (H, D_VIS, F_OUT)
    a_src = np.asarray(a_src, np.float32).reshape(N_HEADS, F_OUT)
    a_dst = np.asarray(a_dst, np.float32).reshape(N_HEADS, F_OUT)
    q = np.asarray(q, np.float32).reshape(D_CAT)
    w_final = np.asarray(w_final, np.float32)                     # (D_CAT, E_DIM)
    b_final = np.asarray(b_final, np.float32).reshape(1, E_DIM)

    # per-head weights fused along lanes: x @ W for all heads at once
    w_lab_cat = np.transpose(w_lab, (1, 0, 2)).reshape(D_LAB, D_CAT)
    w_vis_cat = np.transpose(w_vis, (1, 0, 2)).reshape(D_VIS, D_CAT)
    w_cat = np.concatenate([w_lab_cat, w_vis_cat], axis=0)        # (D_IN, D_CAT)

    # fused, head-block-masked attention vectors:  wh @ A -> [e_src | e_dst]
    a_fused = np.zeros((D_CAT, 2 * N_HEADS), np.float32)
    for h in range(N_HEADS):
        a_fused[h * F_OUT:(h + 1) * F_OUT, h] = a_src[h]
        a_fused[h * F_OUT:(h + 1) * F_OUT, N_HEADS + h] = a_dst[h]

    # block-diagonal adjacency for the (head, image, node) x (image, node) slab
    adj_bd = np.zeros((HBN, BN), np.float32)
    for h in range(N_HEADS):
        for i in range(B):
            r0 = h * BN + i * N
            adj_bd[r0:r0 + N, i * N:(i + 1) * N] = adj

    # head selector on the stacked row axis
    head_sel = np.zeros((HBN, N_HEADS), np.float32)
    for h in range(N_HEADS):
        head_sel[h * BN:(h + 1) * BN, h] = 1.0

    # per-image node selector (pooling sums)
    gsel = np.zeros((B, BN), np.float32)
    for i in range(B):
        gsel[i, i * N:(i + 1) * N] = 1.0

    # head-column mask for the concat-heads selection
    headmask = np.zeros((N_HEADS, D_CAT), np.float32)
    for h in range(N_HEADS):
        headmask[h, h * F_OUT:(h + 1) * F_OUT] = 1.0

    slab = np.zeros((SLAB_ROWS, SLAB_COLS), np.float32)
    slab[R_W:R_W + D_IN, 0:D_CAT] = w_cat
    slab[R_W:R_W + D_CAT, C_A:C_A + 2 * N_HEADS] = a_fused
    slab[R_W:R_W + D_CAT, C_WF:C_WF + E_DIM] = w_final
    slab[R_BIG:R_BIG + HBN, 0:BN] = adj_bd
    slab[R_BIG:R_BIG + HBN, BN:BN + N_HEADS] = head_sel
    slab[R_LAB:R_LAB + N, 0:D_LAB] = lab
    slab[R_GSEL:R_GSEL + B, 0:BN] = gsel
    slab[R_HMASK:R_HMASK + N_HEADS, 0:D_CAT] = headmask
    slab[R_Q, 0:D_CAT] = q
    slab[R_BIAS:R_BIAS + 1, 0:E_DIM] = b_final
    return jnp.asarray(slab)


@jax.jit
def fgsbir_gat_forward(visual_features, param_slab):
    """Jitted per-call forward: exactly one pallas_call, two input DMAs."""
    return pl.pallas_call(
        fgsbir_gat_kernel,
        out_shape=jax.ShapeDtypeStruct((B, E_DIM), jnp.float32),
        in_specs=[pl.BlockSpec(memory_space=pltpu.MemorySpace.VMEM),
                  pl.BlockSpec(memory_space=pltpu.MemorySpace.VMEM)],
        out_specs=pl.BlockSpec(memory_space=pltpu.MemorySpace.VMEM),
    )(visual_features, param_slab)


def reference_forward(visual_features, labels_features, adj,
                      w_lab, w_vis, a_src, a_dst, q, w_final, b_final):
    """Plain-JAX replica of the PyTorch forward (eval mode)."""
    outs = []
    for i in range(B):
        x_lab = labels_features                     # (N, D_LAB)
        x_vis = visual_features[i:i + 1]            # (1, D_VIS)
        heads = []
        for h in range(N_HEADS):
            wh = x_lab @ w_lab[h] + x_vis @ w_vis[h]            # (N, F_OUT)
            e_src = jnp.sum(wh * a_src[h], axis=-1, keepdims=True)
            e_dst = jnp.sum(wh * a_dst[h], axis=-1, keepdims=True)
            e = e_src + e_dst.T
            e = jnp.where(e > 0, e, ALPHA * e)
            e = jnp.where(adj > 0, e, NEG_INF)
            attn = jax.nn.softmax(e, axis=-1)
            heads.append(attn @ wh)
        h_cat = jnp.concatenate(heads, axis=-1)
        h_act = jnp.where(h_cat > 0, h_cat, jnp.exp(jnp.minimum(h_cat, 0.0)) - 1.0)
        scores = (h_act @ q)[:, 0]
        w = jax.nn.softmax(scores, axis=0)
        pooled = jnp.sum(h_act * w[:, None], axis=0)
        outs.append(pooled @ w_final + b_final[0])
    return jnp.stack(outs, axis=0)


if __name__ == "__main__":
    key = jax.random.PRNGKey(0)
    keys = jax.random.split(key, 12)

    visual_features = jax.random.normal(keys[0], (B, D_VIS), jnp.float32)
    labels_features = jax.random.normal(keys[1], (N, D_LAB), jnp.float32)
    adj = (jax.random.uniform(keys[2], (N, N)) < 0.5).astype(jnp.float32)
    adj = jnp.clip(adj + adj.T + jnp.eye(N, dtype=jnp.float32), 0.0, 1.0)

    # GAT layer parameters (per head), split along the concat axis of the input
    w_lab = 0.1 * jax.random.normal(keys[3], (N_HEADS, D_LAB, F_OUT), jnp.float32)
    w_vis = 0.1 * jax.random.normal(keys[4], (N_HEADS, D_VIS, F_OUT), jnp.float32)
    a_src = 0.1 * jax.random.normal(keys[5], (N_HEADS, 1, F_OUT), jnp.float32)
    a_dst = 0.1 * jax.random.normal(keys[6], (N_HEADS, 1, F_OUT), jnp.float32)

    # attention pooling query and final fc (stored transposed: x @ W + b)
    q = 0.1 * jax.random.normal(keys[7], (D_CAT, 1), jnp.float32)
    w_final = 0.1 * jax.random.normal(keys[8], (D_CAT, E_DIM), jnp.float32)
    b_final = 0.1 * jax.random.normal(keys[9], (1, E_DIM), jnp.float32)

    # one-time host-side packing of all static tensors (outside the jitted call)
    param_slab = pack_params(labels_features, adj, w_lab, w_vis, a_src, a_dst,
                             q, w_final, b_final)

    out = fgsbir_gat_forward(visual_features, param_slab)
    out = jax.block_until_ready(out)

    ref = reference_forward(visual_features, labels_features, adj,
                            w_lab, w_vis, a_src, a_dst, q, w_final, b_final)
    # Exact softmax divisions now -> tolerance tightened to 5e-3 (covers only
    # MXU f32 multi-pass vs XLA dot precision differences, not approximations).
    np.testing.assert_allclose(np.asarray(out), np.asarray(ref), rtol=5e-3, atol=5e-3)

    print("KERNEL_OK")
</pallas_src>

<mosaic_0001>
module attributes {stable_mosaic.version = 11 : i64} {
  func.func @fgsbir_gat_kernel(%arg0: memref<2x16xf32, #tpu.memory_space<vmem>>, %arg1: memref<136x128xf32, #tpu.memory_space<vmem>>, %arg2: memref<2x16xf32, #tpu.memory_space<vmem>>) attributes {dimension_semantics = [], scalar_prefetch = 0 : i64, scratch_operands = 0 : i64, tpu.core_type = #tpu.core_type<tc>} {
    %c0 = arith.constant 0 : index
    %c0_0 = arith.constant 0 : index
    %0 = vector.load %arg1[%c0, %c0_0] : memref<136x128xf32, #tpu.memory_space<vmem>>, vector<16x32xf32>
    %c16 = arith.constant 16 : index
    %c0_1 = arith.constant 0 : index
    %1 = vector.load %arg1[%c16, %c0_1] : memref<136x128xf32, #tpu.memory_space<vmem>>, vector<16x32xf32>
    %c0_2 = arith.constant 0 : index
    %c32 = arith.constant 32 : index
    %2 = vector.load %arg1[%c0_2, %c32] : memref<136x128xf32, #tpu.memory_space<vmem>>, vector<32x8xf32>
    %c0_3 = arith.constant 0 : index
    %c40 = arith.constant 40 : index
    %3 = vector.load %arg1[%c0_3, %c40] : memref<136x128xf32, #tpu.memory_space<vmem>>, vector<32x16xf32>
    %c32_4 = arith.constant 32 : index
    %c0_5 = arith.constant 0 : index
    %4 = vector.load %arg1[%c32_4, %c0_5] : memref<136x128xf32, #tpu.memory_space<vmem>>, vector<64x16xf32>
    %c32_6 = arith.constant 32 : index
    %c16_7 = arith.constant 16 : index
    %5 = vector.load %arg1[%c32_6, %c16_7] : memref<136x128xf32, #tpu.memory_space<vmem>>, vector<64x4xf32>
    %c96 = arith.constant 96 : index
    %c0_8 = arith.constant 0 : index
    %6 = vector.load %arg1[%c96, %c0_8] : memref<136x128xf32, #tpu.memory_space<vmem>>, vector<8x16xf32>
    %c104 = arith.constant 104 : index
    %c0_9 = arith.constant 0 : index
    %7 = vector.load %arg1[%c104, %c0_9] : memref<136x128xf32, #tpu.memory_space<vmem>>, vector<2x16xf32>
    %c112 = arith.constant 112 : index
    %c0_10 = arith.constant 0 : index
    %8 = vector.load %arg1[%c112, %c0_10] : memref<136x128xf32, #tpu.memory_space<vmem>>, vector<4x32xf32>
    %c120 = arith.constant 120 : index
    %c0_11 = arith.constant 0 : index
    %9 = vector.load %arg1[%c120, %c0_11] : memref<136x128xf32, #tpu.memory_space<vmem>>, vector<1x32xf32>
    %c128 = arith.constant 128 : index
    %c0_12 = arith.constant 0 : index
    %10 = vector.load %arg1[%c128, %c0_12] : memref<136x128xf32, #tpu.memory_space<vmem>>, vector<1x16xf32>
    %c0_13 = arith.constant 0 : index
    %c0_14 = arith.constant 0 : index
    %11 = vector.load %arg0[%c0_13, %c0_14] : memref<2x16xf32, #tpu.memory_space<vmem>>, vector<2x16xf32>
    %cst = arith.constant dense<0.000000e+00> : vector<8x32xf32>
    %12 = tpu.matmul %6, %0, %cst {dimension_numbers = #tpu.dot_dimension_numbers<[1], [0], [0], [1], [0, 0, 1, 1], [], []>} : vector<8x16xf32>, vector<16x32xf32>, vector<8x32xf32> -> vector<8x32xf32>
    %cst_15 = arith.constant dense<0.000000e+00> : vector<2x32xf32>
    %13 = tpu.matmul %11, %1, %cst_15 {dimension_numbers = #tpu.dot_dimension_numbers<[1], [0], [0], [1], [0, 0, 1, 1], [], []>} : vector<2x16xf32>, vector<16x32xf32>, vector<2x32xf32> -> vector<2x32xf32>
    %14 = vector.extract_strided_slice %13 {offsets = [0, 0], sizes = [1, 32], strides = [1, 1]} : vector<2x32xf32> to vector<1x32xf32>
    %15 = vector.broadcast %14 : vector<1x32xf32> to vector<8x32xf32>
    %16 = arith.addf %12, %15 : vector<8x32xf32>
    %17 = vector.extract_strided_slice %13 {offsets = [1, 0], sizes = [1, 32], strides = [1, 1]} : vector<2x32xf32> to vector<1x32xf32>
    %18 = vector.broadcast %17 : vector<1x32xf32> to vector<8x32xf32>
    %19 = arith.addf %12, %18 : vector<8x32xf32>
    %20 = tpu.concatenate %16, %19 in 0 : vector<8x32xf32>, vector<8x32xf32> -> vector<16x32xf32>
    %cst_16 = arith.constant dense<0.000000e+00> : vector<16x8xf32>
    %21 = tpu.matmul %20, %2, %cst_16 {dimension_numbers = #tpu.dot_dimension_numbers<[1], [0], [0], [1], [0, 0, 1, 1], [], []>} : vector<16x32xf32>, vector<32x8xf32>, vector<16x8xf32> -> vector<16x8xf32>
    %22 = vector.extract_strided_slice %21 {offsets = [0, 0], sizes = [16, 4], strides = [1, 1]} : vector<16x8xf32> to vector<16x4xf32>
    %23 = vector.extract_strided_slice %21 {offsets = [0, 4], sizes = [16, 4], strides = [1, 1]} : vector<16x8xf32> to vector<16x4xf32>
    %24 = tpu.concatenate %22, %22, %22, %22 in 0 : vector<16x4xf32>, vector<16x4xf32>, vector<16x4xf32>, vector<16x4xf32> -> vector<64x4xf32>
    %25 = arith.mulf %24, %5 : vector<64x4xf32>
    %cst_17 = arith.constant dense<0.000000e+00> : vector<64xf32>
    %26 = vector.multi_reduction <add>, %25, %cst_17 [1] : vector<64x4xf32> to vector<64xf32>
    %27 = vector.shape_cast %26 : vector<64xf32> to vector<64x1xf32>
    "tpu.trace_start"() <{level = 10 : i32, message = "rh,mh->rm"}> : () -> ()
    %cst_18 = arith.constant dense<0.000000e+00> : vector<64x16xf32>
    %28 = tpu.matmul %5, %23, %cst_18 {dimension_numbers = #tpu.dot_dimension_numbers<[1], [1], [0], [0], [0, 0, 1, 0], [], []>} : vector<64x4xf32>, vector<16x4xf32>, vector<64x16xf32> -> vector<64x16xf32>
    "tpu.trace_stop"() : () -> ()
    %29 = vector.broadcast %27 : vector<64x1xf32> to vector<64x16xf32>
    %30 = arith.addf %29, %28 : vector<64x16xf32>
    %cst_19 = arith.constant 0.000000e+00 : f32
    %31 = vector.broadcast %cst_19 : f32 to vector<64x16xf32>
    %32 = arith.cmpf ogt, %30, %31 : vector<64x16xf32>
    %cst_20 = arith.constant 2.000000e-01 : f32
    %33 = vector.broadcast %cst_20 : f32 to vector<64x16xf32>
    %34 = arith.mulf %33, %30 : vector<64x16xf32>
    %35 = arith.select %32, %30, %34 : vector<64x16xi1>, vector<64x16xf32>
    %cst_21 = arith.constant 0.000000e+00 : f32
    %36 = vector.broadcast %cst_21 : f32 to vector<64x16xf32>
    %37 = arith.cmpf ogt, %4, %36 : vector<64x16xf32>
    %cst_22 = arith.constant -9.000000e+15 : f32
    %38 = vector.broadcast %cst_22 : f32 to vector<64x16xf32>
    %39 = arith.select %37, %35, %38 : vector<64x16xi1>, vector<64x16xf32>
    %cst_23 = arith.constant dense<0xFF800000> : vector<64xf32>
    %40 = vector.multi_reduction <maximumf>, %39, %cst_23 [1] : vector<64x16xf32> to vector<64xf32>
    %41 = vector.shape_cast %40 : vector<64xf32> to vector<64x1xf32>
    %42 = vector.broadcast %41 : vector<64x1xf32> to vector<64x16xf32>
    %43 = arith.subf %39, %42 : vector<64x16xf32>
    %44 = math.exp %43 : vector<64x16xf32>
    %cst_24 = arith.constant dense<0.000000e+00> : vector<64xf32>
    %45 = vector.multi_reduction <add>, %44, %cst_24 [1] : vector<64x16xf32> to vector<64xf32>
    %46 = vector.shape_cast %45 : vector<64xf32> to vector<64x1xf32>
    %47 = vector.broadcast %46 : vector<64x1xf32> to vector<64x16xf32>
    %48 = arith.divf %44, %47 : vector<64x16xf32>
    %cst_25 = arith.constant dense<0.000000e+00> : vector<64x32xf32>
    %49 = tpu.matmul %48, %20, %cst_25 {dimension_numbers = #tpu.dot_dimension_numbers<[1], [0], [0], [1], [0, 0, 1, 1], [], []>} : vector<64x16xf32>, vector<16x32xf32>, vector<64x32xf32> -> vector<64x32xf32>
    %cst_26 = arith.constant 0.000000e+00 : f32
    %50 = vector.broadcast %cst_26 : f32 to vector<16x32xf32>
    %51 = vector.extract_strided_slice %49 {offsets = [0, 0], sizes = [16, 32], strides = [1, 1]} : vector<64x32xf32> to vector<16x32xf32>
    %52 = vector.extract_strided_slice %8 {offsets = [0, 0], sizes = [1, 32], strides = [1, 1]} : vector<4x32xf32> to vector<1x32xf32>
    %53 = vector.broadcast %52 : vector<1x32xf32> to vector<16x32xf32>
    %54 = arith.mulf %51, %53 : vector<16x32xf32>
    %55 = arith.addf %50, %54 : vector<16x32xf32>
    %56 = vector.extract_strided_slice %49 {offsets = [16, 0], sizes = [16, 32], strides = [1, 1]} : vector<64x32xf32> to vector<16x32xf32>
    %57 = vector.extract_strided_slice %8 {offsets = [1, 0], sizes = [1, 32], strides = [1, 1]} : vector<4x32xf32> to vector<1x32xf32>
    %58 = vector.broadcast %57 : vector<1x32xf32> to vector<16x32xf32>
    %59 = arith.mulf %56, %58 : vector<16x32xf32>
    %60 = arith.addf %55, %59 : vector<16x32xf32>
    %61 = vector.extract_strided_slice %49 {offsets = [32, 0], sizes = [16, 32], strides = [1, 1]} : vector<64x32xf32> to vector<16x32xf32>
    %62 = vector.extract_strided_slice %8 {offsets = [2, 0], sizes = [1, 32], strides = [1, 1]} : vector<4x32xf32> to vector<1x32xf32>
    %63 = vector.broadcast %62 : vector<1x32xf32> to vector<16x32xf32>
    %64 = arith.mulf %61, %63 : vector<16x32xf32>
    %65 = arith.addf %60, %64 : vector<16x32xf32>
    %66 = vector.extract_strided_slice %49 {offsets = [48, 0], sizes = [16, 32], strides = [1, 1]} : vector<64x32xf32> to vector<16x32xf32>
    %67 = vector.extract_strided_slice %8 {offsets = [3, 0], sizes = [1, 32], strides = [1, 1]} : vector<4x32xf32> to vector<1x32xf32>
    %68 = vector.broadcast %67 : vector<1x32xf32> to vector<16x32xf32>
    %69 = arith.mulf %66, %68 : vector<16x32xf32>
    %70 = arith.addf %65, %69 : vector<16x32xf32>
    %cst_27 = arith.constant 0.000000e+00 : f32
    %71 = vector.broadcast %cst_27 : f32 to vector<16x32xf32>
    %72 = arith.cmpf ogt, %70, %71 : vector<16x32xf32>
    %cst_28 = arith.constant 0.000000e+00 : f32
    %73 = vector.broadcast %cst_28 : f32 to vector<16x32xf32>
    %74 = arith.minimumf %70, %73 : vector<16x32xf32>
    %75 = math.exp %74 : vector<16x32xf32>
    %cst_29 = arith.constant 1.000000e+00 : f32
    %76 = vector.broadcast %cst_29 : f32 to vector<16x32xf32>
    %77 = arith.subf %75, %76 : vector<16x32xf32>
    %78 = arith.select %72, %70, %77 : vector<16x32xi1>, vector<16x32xf32>
    %79 = vector.broadcast %9 : vector<1x32xf32> to vector<16x32xf32>
    %80 = arith.mulf %78, %79 : vector<16x32xf32>
    %cst_30 = arith.constant dense<0.000000e+00> : vector<16xf32>
    %81 = vector.multi_reduction <add>, %80, %cst_30 [1] : vector<16x32xf32> to vector<16xf32>
    %82 = vector.shape_cast %81 : vector<16xf32> to vector<16x1xf32>
    %cst_31 = arith.constant dense<0xFF800000> : vector<1xf32>
    %83 = vector.multi_reduction <maximumf>, %82, %cst_31 [0] : vector<16x1xf32> to vector<1xf32>
    %84 = vector.shape_cast %83 : vector<1xf32> to vector<1x1xf32>
    %85 = vector.broadcast %84 : vector<1x1xf32> to vector<16x1xf32>
    %86 = arith.subf %82, %85 : vector<16x1xf32>
    %87 = math.exp %86 : vector<16x1xf32>
    %88 = vector.broadcast %87 : vector<16x1xf32> to vector<16x32xf32>
    %89 = arith.mulf %78, %88 : vector<16x32xf32>
    %cst_32 = arith.constant dense<0.000000e+00> : vector<2x32xf32>
    %90 = tpu.matmul %7, %89, %cst_32 {dimension_numbers = #tpu.dot_dimension_numbers<[1], [0], [0], [1], [0, 0, 1, 1], [], []>} : vector<2x16xf32>, vector<16x32xf32>, vector<2x32xf32> -> vector<2x32xf32>
    %cst_33 = arith.constant dense<0.000000e+00> : vector<2x1xf32>
    %91 = tpu.matmul %7, %87, %cst_33 {dimension_numbers = #tpu.dot_dimension_numbers<[1], [0], [0], [1], [0, 0, 1, 1], [], []>} : vector<2x16xf32>, vector<16x1xf32>, vector<2x1xf32> -> vector<2x1xf32>
    %92 = vector.broadcast %91 : vector<2x1xf32> to vector<2x32xf32>
    %93 = arith.divf %90, %92 : vector<2x32xf32>
    %cst_34 = arith.constant dense<0.000000e+00> : vector<2x16xf32>
    %94 = tpu.matmul %93, %3, %cst_34 {dimension_numbers = #tpu.dot_dimension_numbers<[1], [0], [0], [1], [0, 0, 1, 1], [], []>} : vector<2x32xf32>, vector<32x16xf32>, vector<2x16xf32> -> vector<2x16xf32>
    %95 = vector.broadcast %10 : vector<1x16xf32> to vector<2x16xf32>
    %96 = arith.addf %94, %95 : vector<2x16xf32>
    %c0_35 = arith.constant 0 : index
    %c0_36 = arith.constant 0 : index
    %97 = vector.load %arg2[%c0_35, %c0_36] : memref<2x16xf32, #tpu.memory_space<vmem>>, vector<2x16xf32>
    tpu.vector_store %arg2[%c0_35, %c0_36], %96 {strides = array<i32>} : memref<2x16xf32, #tpu.memory_space<vmem>>, vector<2x16xf32>,
    return
  }
}

</mosaic_0001>

<llo_original>
// kernel: fgsbir_gat_forward.1
$region0: #{fgsbir_gat_forward.1}
  #allocation0 [shape = 'u32[]', space=smem, size = 0x4, offset = 0x4, fixed_abs, tag = 'smem constant byte address 0x4 - core index']
  #allocation1 [shape = 'u32[144,128]{1,0:T(1,128)}', space=vmem, size = 0x12000, scoped, tag = 'internal scratch']
  %s0 = inlined_call_operand.hbm [shape: f32[2,16], index: 0, kind: input, shape index: {}]
  %s1 = inlined_call_operand.hbm [shape: f32[136,128], index: 1, kind: input, shape index: {}]
  %s2 = inlined_call_operand.hbm [shape: f32[2,16], index: 2, kind: output, shape index: {}]
  %s3 = sld [smem:[#allocation0]]
  $region26: #{fgsbir_gat_forward.1} parent=0
    _
  %s5 = ssub.s32 1, %s3
  %s6 = scalar_select 0, %s5, %s3
  $region1: #{fgsbir_gat_forward.1} parent=0
    #allocation2 [shape = 'u8[1024]{0}', space=vmem, size = 0x400, scoped, tag = 'input window, operand 0, single buffered']
    #allocation3 [shape = 's32[1]{0}', space=sflag, size = 0x4, scoped, tag = 'scoped memory for fgsbir_gat_forward.1']
    #allocation4 [shape = 's32[1]{0}', space=sflag, size = 0x4, scoped, tag = 'scoped memory for fgsbir_gat_forward.1']
    #allocation5 [shape = 'u8[69632]{0}', space=vmem, size = 0x11000, scoped, tag = 'input window, operand 1, single buffered']
    #allocation6 [shape = 's32[1]{0}', space=sflag, size = 0x4, scoped, tag = 'scoped memory for fgsbir_gat_forward.1']
    #allocation7 [shape = 'u8[1024]{0}', space=vmem, size = 0x400, scoped, tag = 'output window, operand 0, single buffered']
    %7 = vsyncpa [#allocation3], 0
    %8 = vsyncpa [#allocation6], 0
    %9 = vsyncpa [#allocation4], 0
    // Predicated region
    $region2: #{fgsbir_gat_forward.1} parent=1 // pred_check
      _
    $region3: #{fgsbir_gat_forward.1} parent=1 // pred_check_branch
      %11 = sbr.rel (0) target = $region5
    $region4: #{fgsbir_gat_forward.1} parent=1 // pred_region
      %s13 = ssub.s32 32, 32
      %14 = vsyncadd [#allocation3], %s13
      %s16 = sshll.u32 [#allocation2], 4
      %s17 = int_to_ptr.vmem [resolvable:$true] %s16
      %19 = dma.hbm_to_vmem [thread:$0]  %s0, 32, %s17, [#allocation3]
    $region5: #{fgsbir_gat_forward.1} parent=1 // pred_fallthru
      _
    // Predicated region
    $region6: #{fgsbir_gat_forward.1} parent=1 // pred_check
      _
    $region7: #{fgsbir_gat_forward.1} parent=1 // pred_check_branch
      %21 = sbr.rel (0) target = $region9
    $region8: #{fgsbir_gat_forward.1} parent=1 // pred_region
      %s23 = ssub.s32 2176, 2176
      %24 = vsyncadd [#allocation6], %s23
      %s25 = sshll.u32 [#allocation5], 4
      %s26 = int_to_ptr.vmem [resolvable:$true] %s25
      %31 = dma.hbm_to_vmem [thread:$0]  %s1, 2176, %s26, [#allocation6], 128, 128, 8
    $region9: #{fgsbir_gat_forward.1} parent=1 // pred_fallthru
      _
    // Predicated region
    $region10: #{fgsbir_gat_forward.1} parent=1 // pred_check
      _
    $region11: #{fgsbir_gat_forward.1} parent=1 // pred_check_branch
      %33 = sbr.rel (0) target = $region13
    $region12: #{fgsbir_gat_forward.1} parent=1 // pred_region
      %34 = dma.done [#allocation3], 32
    $region13: #{fgsbir_gat_forward.1} parent=1 // pred_fallthru
      _
    // Predicated region
    $region14: #{fgsbir_gat_forward.1} parent=1 // pred_check
      _
    $region15: #{fgsbir_gat_forward.1} parent=1 // pred_check_branch
      %36 = sbr.rel (0) target = $region17
    $region16: #{fgsbir_gat_forward.1} parent=1 // pred_region
      %37 = dma.done [#allocation6], 2176
    $region17: #{fgsbir_gat_forward.1} parent=1 // pred_fallthru
      _
    %v38 = vld [vmem:[#allocation5] sm:$0xff]
    %v39 = vld [vmem:[#allocation5 + $0x8] sm:$0xff]
    %v40 = vld [vmem:[#allocation5 + $0x10] sm:$0xff]
    %v41 = vld [vmem:[#allocation5 + $0x18] sm:$0xff]
    %v42 = vld [vmem:[#allocation5 + $0x20] sm:$0xff]
    %v43 = vld [vmem:[#allocation5 + $0x28] sm:$0xff]
    %v44 = vld [vmem:[#allocation5 + $0x30] sm:$0xff]
    %v45 = vld [vmem:[#allocation5 + $0x38] sm:$0xff]
    %v46 = vld [vmem:[#allocation5 + $0x40] sm:$0xff]
    %v47 = vld [vmem:[#allocation5 + $0x48] sm:$0xff]
    %v48 = vld [vmem:[#allocation5 + $0x50] sm:$0xff]
    %v49 = vld [vmem:[#allocation5 + $0x58] sm:$0xff]
    %v50 = vld [vmem:[#allocation5 + $0x60] sm:$0xff]
    %v51 = vld [vmem:[#allocation5 + $0x68] sm:$0x3]
    %v52 = vld [vmem:[#allocation5 + $0x70] sm:$0xf]
    %v53 = vld [vmem:[#allocation5 + $0x78] sm:$0x1]
    %v54 = vld [vmem:[#allocation5 + $0x80] sm:$0x1]
    %v55 = vld [vmem:[#allocation2] sm:$0x3]
    %vm56 = vcmask 130048
    %v58 = vsel %vm56, %v50, 0
    %60 = vmatprep.subr.mxu0 0.0
    %61 = vmatpush1.msra.mxu0 0.0
    %62 = vmatprep.subr.mxu0 0.0
    %63 = vmatpush1.msra.mxu0 0.0
    %64 = vmatprep.subr.mxu0 0.0
    %65 = vmatpush1.msra.mxu0 0.0
    %66 = vmatprep.subr.mxu0 0.0
    %67 = vmatpush1.msra.mxu0 0.0
    %68 = vmatprep.subr.mxu0 0.0
    %69 = vmatpush1.msra.mxu0 0.0
    %70 = vmatprep.subr.mxu0 0.0
    %71 = vmatpush1.msra.mxu0 0.0
    %72 = vmatprep.subr.mxu0 0.0
    %73 = vmatpush1.msra.mxu0 0.0
    %74 = vmatprep.subr.mxu0 0.0
    %75 = vmatpush1.msra.mxu0 0.0
    %76 = vmatprep.subr.mxu0 0.0
    %77 = vmatpush1.msra.mxu0 0.0
    %78 = vmatprep.subr.mxu0 0.0
    %79 = vmatpush1.msra.mxu0 0.0
    %80 = vmatprep.subr.mxu0 0.0
    %81 = vmatpush1.msra.mxu0 0.0
    %82 = vmatprep.subr.mxu0 0.0
    %83 = vmatpush1.msra.mxu0 0.0
    %84 = vmatprep.subr.mxu0 0.0
    %85 = vmatpush1.msra.mxu0 0.0
    %86 = vmatprep.subr.mxu0 0.0
    %87 = vmatpush1.msra.mxu0 0.0
    %88 = vmatprep.subr.mxu0 0.0
    %89 = vmatpush1.msra.mxu0 %v39
    %90 = vmatprep.subr.mxu0 0.0
    %91 = vmatpush1.msra.mxu0 %v38
    %92 = vmatprep.subr.mxu0 0.0
    %93 = vmatpush2.msra.mxu0 0.0
    %94 = vmatprep.subr.mxu0 0.0
    %95 = vmatpush2.msra.mxu0 0.0
    %96 = vmatprep.subr.mxu0 0.0
    %97 = vmatpush2.msra.mxu0 0.0
    %98 = vmatprep.subr.mxu0 0.0
    %99 = vmatpush2.msra.mxu0 0.0
    %100 = vmatprep.subr.mxu0 0.0
    %101 = vmatpush2.msra.mxu0 0.0
    %102 = vmatprep.subr.mxu0 0.0
    %103 = vmatpush2.msra.mxu0 0.0
    %104 = vmatprep.subr.mxu0 0.0
    %105 = vmatpush2.msra.mxu0 0.0
    %106 = vmatprep.subr.mxu0 0.0
    %107 = vmatpush2.msra.mxu0 0.0
    %108 = vmatprep.subr.mxu0 0.0
    %109 = vmatpush2.msra.mxu0 0.0
    %110 = vmatprep.subr.mxu0 0.0
    %111 = vmatpush2.msra.mxu0 0.0
    %112 = vmatprep.subr.mxu0 0.0
    %113 = vmatpush2.msra.mxu0 0.0
    %114 = vmatprep.subr.mxu0 0.0
    %115 = vmatpush2.msra.mxu0 0.0
    %116 = vmatprep.subr.mxu0 0.0
    %117 = vmatpush2.msra.mxu0 0.0
    %118 = vmatprep.subr.mxu0 0.0
    %119 = vmatpush2.msra.mxu0 0.0
    %120 = vmatprep.subr.mxu0 0.0
    %121 = vmatpush2.msra.mxu0 0.0
    %122 = vmatprep.subr.mxu0 0.0
    %123 = vmatpush2.msra.mxu0 0.0
    %124 = vmatprep.mubr.f32.mxu0 0.0
    %125 = vmatmul.mubr.f32.gmra.mxu0 %v58
    %v126 = vpop.f32.mrf.mxu0
    %v127 = vadd.f32 0.0, %v126
    %v128 = vpop.f32.mrf.mxu0
    %129 = vdwg.mxu0
    %v131 = vsel %vm56, %v55, 0
    %133 = vmatprep.subr.mxu0 0.0
    %134 = vmatpush1.msra.mxu0 0.0
    %135 = vmatprep.subr.mxu0 0.0
    %136 = vmatpush1.msra.mxu0 0.0
    %137 = vmatprep.subr.mxu0 0.0
    %138 = vmatpush1.msra.mxu0 0.0
    %139 = vmatprep.subr.mxu0 0.0
    %140 = vmatpush1.msra.mxu0 0.0
    %141 = vmatprep.subr.mxu0 0.0
    %142 = vmatpush1.msra.mxu0 0.0
    %143 = vmatprep.subr.mxu0 0.0
    %144 = vmatpush1.msra.mxu0 0.0
    %145 = vmatprep.subr.mxu0 0.0
    %146 = vmatpush1.msra.mxu0 0.0
    %147 = vmatprep.subr.mxu0 0.0
    %148 = vmatpush1.msra.mxu0 0.0
    %149 = vmatprep.subr.mxu0 0.0
    %150 = vmatpush1.msra.mxu0 0.0
    %151 = vmatprep.subr.mxu0 0.0
    %152 = vmatpush1.msra.mxu0 0.0
    %153 = vmatprep.subr.mxu0 0.0
    %154 = vmatpush1.msra.mxu0 0.0
    %155 = vmatprep.subr.mxu0 0.0
    %156 = vmatpush1.msra.mxu0 0.0
    %157 = vmatprep.subr.mxu0 0.0
    %158 = vmatpush1.msra.mxu0 0.0
    %159 = vmatprep.subr.mxu0 0.0
    %160 = vmatpush1.msra.mxu0 0.0
    %161 = vmatprep.subr.mxu0 0.0
    %162 = vmatpush1.msra.mxu0 %v41
    %163 = vmatprep.subr.mxu0 0.0
    %164 = vmatpush1.msra.mxu0 %v40
    %165 = vmatprep.subr.mxu0 0.0
    %166 = vmatpush2.msra.mxu0 0.0
    %167 = vmatprep.subr.mxu0 0.0
    %168 = vmatpush2.msra.mxu0 0.0
    %169 = vmatprep.subr.mxu0 0.0
    %170 = vmatpush2.msra.mxu0 0.0
    %171 = vmatprep.subr.mxu0 0.0
    %172 = vmatpush2.msra.mxu0 0.0
    %173 = vmatprep.subr.mxu0 0.0
    %174 = vmatpush2.msra.mxu0 0.0
    %175 = vmatprep.subr.mxu0 0.0
    %176 = vmatpush2.msra.mxu0 0.0
    %177 = vmatprep.subr.mxu0 0.0
    %178 = vmatpush2.msra.mxu0 0.0
    %179 = vmatprep.subr.mxu0 0.0
    %180 = vmatpush2.msra.mxu0 0.0
    %181 = vmatprep.subr.mxu0 0.0
    %182 = vmatpush2.msra.mxu0 0.0
    %183 = vmatprep.subr.mxu0 0.0
    %184 = vmatpush2.msra.mxu0 0.0
    %185 = vmatprep.subr.mxu0 0.0
    %186 = vmatpush2.msra.mxu0 0.0
    %187 = vmatprep.subr.mxu0 0.0
    %188 = vmatpush2.msra.mxu0 0.0
    %189 = vmatprep.subr.mxu0 0.0
    %190 = vmatpush2.msra.mxu0 0.0
    %191 = vmatprep.subr.mxu0 0.0
    %192 = vmatpush2.msra.mxu0 0.0
    %193 = vmatprep.subr.mxu0 0.0
    %194 = vmatpush2.msra.mxu0 0.0
    %195 = vmatprep.subr.mxu0 0.0
    %196 = vmatpush2.msra.mxu0 0.0
    %197 = vmatprep.mubr.f32.mxu0 0.0
    %198 = vmatmul.mubr.f32.gmra.mxu0 %v131
    %v199 = vpop.f32.mrf.mxu0
    %v200 = vadd.f32 0.0, %v199
    %v201 = vpop.f32.mrf.mxu0
    %202 = vdwg.mxu0
    %v203 = vlaneseq
    %v204 = vshrl.u32 %v203, 7
    %v205 = vsub.s32 0, %v204
    %v206 = vrot.slane %v200, %v205
    %v207 = vadd.f32 %v127, %v206
    %v208 = vlaneseq
    %v209 = vshrl.u32 %v208, 7
    %v210 = vsub.s32 1, %v209
    %v211 = vrot.slane %v200, %v210
    %v212 = vadd.f32 %v127, %v211
    %217 = vrot.lane.b32.xlu0 %v38, 96
    %v218 = vpop.permute.xlu0 %217
    %219 = vrot.lane.b32.xlu0 %v39, 96
    %v220 = vpop.permute.xlu0 %219
    %221 = vrot.lane.b32.xlu0 %v40, 96
    %v222 = vpop.permute.xlu0 %221
    %223 = vrot.lane.b32.xlu0 %v41, 96
    %v224 = vpop.permute.xlu0 %223
    %vm229 = vcmask 261120
    %v231 = vsel %vm229, %v207, 0
    %v234 = vsel %vm229, %v212, 0
    %236 = vmatprep.subr.mxu0 0.0
    %237 = vmatpush1.msra.mxu0 0.0
    %238 = vmatprep.subr.mxu0 0.0
    %239 = vmatpush1.msra.mxu0 0.0
    %240 = vmatprep.subr.mxu0 0.0
    %241 = vmatpush1.msra.mxu0 0.0
    %242 = vmatprep.subr.mxu0 0.0
    %243 = vmatpush1.msra.mxu0 0.0
    %244 = vmatprep.subr.mxu0 0.0
    %245 = vmatpush1.msra.mxu0 0.0
    %246 = vmatprep.subr.mxu0 0.0
    %247 = vmatpush1.msra.mxu0 0.0
    %248 = vmatprep.subr.mxu0 0.0
    %249 = vmatpush1.msra.mxu0 0.0
    %250 = vmatprep.subr.mxu0 0.0
    %251 = vmatpush1.msra.mxu0 0.0
    %252 = vmatprep.subr.mxu0 0.0
    %253 = vmatpush1.msra.mxu0 0.0
    %254 = vmatprep.subr.mxu0 0.0
    %255 = vmatpush1.msra.mxu0 0.0
    %256 = vmatprep.subr.mxu0 0.0
    %257 = vmatpush1.msra.mxu0 0.0
    %258 = vmatprep.subr.mxu0 0.0
    %259 = vmatpush1.msra.mxu0 0.0
    %260 = vmatprep.subr.mxu0 0.0
    %261 = vmatpush1.msra.mxu0 %v224
    %262 = vmatprep.subr.mxu0 0.0
    %263 = vmatpush1.msra.mxu0 %v222
    %264 = vmatprep.subr.mxu0 0.0
    %265 = vmatpush1.msra.mxu0 %v220
    %266 = vmatprep.subr.mxu0 0.0
    %267 = vmatpush1.msra.mxu0 %v218
    %268 = vmatprep.subr.mxu0 0.0
    %269 = vmatpush2.msra.mxu0 0.0
    %270 = vmatprep.subr.mxu0 0.0
    %271 = vmatpush2.msra.mxu0 0.0
    %272 = vmatprep.subr.mxu0 0.0
    %273 = vmatpush2.msra.mxu0 0.0
    %274 = vmatprep.subr.mxu0 0.0
    %275 = vmatpush2.msra.mxu0 0.0
    %276 = vmatprep.subr.mxu0 0.0
    %277 = vmatpush2.msra.mxu0 0.0
    %278 = vmatprep.subr.mxu0 0.0
    %279 = vmatpush2.msra.mxu0 0.0
    %280 = vmatprep.subr.mxu0 0.0
    %281 = vmatpush2.msra.mxu0 0.0
    %282 = vmatprep.subr.mxu0 0.0
    %283 = vmatpush2.msra.mxu0 0.0
    %284 = vmatprep.subr.mxu0 0.0
    %285 = vmatpush2.msra.mxu0 0.0
    %286 = vmatprep.subr.mxu0 0.0
    %287 = vmatpush2.msra.mxu0 0.0
    %288 = vmatprep.subr.mxu0 0.0
    %289 = vmatpush2.msra.mxu0 0.0
    %290 = vmatprep.subr.mxu0 0.0
    %291 = vmatpush2.msra.mxu0 0.0
    %292 = vmatprep.subr.mxu0 0.0
    %293 = vmatpush2.msra.mxu0 0.0
    %294 = vmatprep.subr.mxu0 0.0
    %295 = vmatpush2.msra.mxu0 0.0
    %296 = vmatprep.subr.mxu0 0.0
    %297 = vmatpush2.msra.mxu0 0.0
    %298 = vmatprep.subr.mxu0 0.0
    %299 = vmatpush2.msra.mxu0 0.0
    %300 = vmatprep.mubr.f32.mxu0 0.0
    %301 = vmatmul.mubr.f32.gmra.mxu0 %v231
    %v302 = vpop.f32.mrf.mxu0
    %v303 = vadd.f32 0.0, %v302
    %v304 = vpop.f32.mrf.mxu0
    %305 = vmatprep.mubr.f32.mxu0 0.0
    %306 = vmatmul.mubr.f32.gmra.mxu0 %v234
    %v307 = vpop.f32.mrf.mxu0
    %v308 = vadd.f32 0.0, %v307
    %v309 = vpop.f32.mrf.mxu0
    %310 = vdwg.mxu0
    %319 = vrot.lane.b32.xlu0 %v42, 112
    %v320 = vpop.permute.xlu0 %319
    %321 = vrot.lane.b32.xlu0 %v43, 112
    %v322 = vpop.permute.xlu0 %321
    %323 = vrot.lane.b32.xlu0 %v44, 112
    %v324 = vpop.permute.xlu0 %323
    %325 = vrot.lane.b32.xlu0 %v45, 112
    %v326 = vpop.permute.xlu0 %325
    %327 = vrot.lane.b32.xlu0 %v46, 112
    %v328 = vpop.permute.xlu0 %327
    %329 = vrot.lane.b32.xlu0 %v47, 112
    %v330 = vpop.permute.xlu0 %329
    %331 = vrot.lane.b32.xlu0 %v48, 112
    %v332 = vpop.permute.xlu0 %331
    %333 = vrot.lane.b32.xlu0 %v49, 112
    %v334 = vpop.permute.xlu0 %333
    %v343 = vmul.f32 %v303, %v320
    %v344 = vmul.f32 %v308, %v322
    %v345 = vmul.f32 %v303, %v324
    %v346 = vmul.f32 %v308, %v326
    %v347 = vmul.f32 %v303, %v328
    %v348 = vmul.f32 %v308, %v330
    %v349 = vmul.f32 %v303, %v332
    %v350 = vmul.f32 %v308, %v334
    %vm351 = vcmask 31744
    %v352 = vsel %vm351, %v343, 0.0
    %353 = vadd.xlane.f32.xlu0 %v352
    %v354 = vpop.xlane.xlu0 %353
    %v355 = vsel %vm351, %v344, 0.0
    %356 = vadd.xlane.f32.xlu0 %v355
    %v357 = vpop.xlane.xlu0 %356
    %v358 = vsel %vm351, %v345, 0.0
    %359 = vadd.xlane.f32.xlu0 %v358
    %v360 = vpop.xlane.xlu0 %359
    %v361 = vsel %vm351, %v346, 0.0
    %362 = vadd.xlane.f32.xlu0 %v361
    %v363 = vpop.xlane.xlu0 %362
    %v364 = vsel %vm351, %v347, 0.0
    %365 = vadd.xlane.f32.xlu0 %v364
    %v366 = vpop.xlane.xlu0 %365
    %v367 = vsel %vm351, %v348, 0.0
    %368 = vadd.xlane.f32.xlu0 %v367
    %v369 = vpop.xlane.xlu0 %368
    %v370 = vsel %vm351, %v349, 0.0
    %371 = vadd.xlane.f32.xlu0 %v370
    %v372 = vpop.xlane.xlu0 %371
    %v373 = vsel %vm351, %v350, 0.0
    %374 = vadd.xlane.f32.xlu0 %v373
    %v375 = vpop.xlane.xlu0 %374
    %378 = vrot.lane.b32.xlu0 %v303, 124
    %v379 = vpop.permute.xlu0 %378
    %380 = vrot.lane.b32.xlu0 %v308, 124
    %v381 = vpop.permute.xlu0 %380
    %v382 = vsel %vm351, %v320, 0
    %v384 = vsel %vm351, %v322, 0
    %v386 = vsel %vm351, %v324, 0
    %v388 = vsel %vm351, %v326, 0
    %v390 = vsel %vm351, %v328, 0
    %v392 = vsel %vm351, %v330, 0
    %v394 = vsel %vm351, %v332, 0
    %v396 = vsel %vm351, %v334, 0
    %v398 = vsel %vm351, %v379, 0
    %v400 = vsel %vm351, %v381, 0
    %402 = vmatprep.subr.mxu0 0.0
    %403 = vmatpush1.xpose.msra.mxu0 0.0
    %404 = vmatprep.subr.mxu0 0.0
    %405 = vmatpush1.xpose.msra.mxu0 0.0
    %406 = vmatprep.subr.mxu0 0.0
    %407 = vmatpush1.xpose.msra.mxu0 0.0
    %408 = vmatprep.subr.mxu0 0.0
    %409 = vmatpush1.xpose.msra.mxu0 0.0
    %410 = vmatprep.subr.mxu0 0.0
    %411 = vmatpush1.xpose.msra.mxu0 0.0
    %412 = vmatprep.subr.mxu0 0.0
    %413 = vmatpush1.xpose.msra.mxu0 0.0
    %414 = vmatprep.subr.mxu0 0.0
    %415 = vmatpush1.xpose.msra.mxu0 0.0
    %416 = vmatprep.subr.mxu0 0.0
    %417 = vmatpush1.xpose.msra.mxu0 0.0
    %418 = vmatprep.subr.mxu0 0.0
    %419 = vmatpush1.xpose.msra.mxu0 0.0
    %420 = vmatprep.subr.mxu0 0.0
    %421 = vmatpush1.xpose.msra.mxu0 0.0
    %422 = vmatprep.subr.mxu0 0.0
    %423 = vmatpush1.xpose.msra.mxu0 0.0
    %424 = vmatprep.subr.mxu0 0.0
    %425 = vmatpush1.xpose.msra.mxu0 0.0
    %426 = vmatprep.subr.mxu0 0.0
    %427 = vmatpush1.xpose.msra.mxu0 0.0
    %428 = vmatprep.subr.mxu0 0.0
    %429 = vmatpush1.xpose.msra.mxu0 0.0
    %430 = vmatprep.subr.mxu0 0.0
    %431 = vmatpush1.xpose.msra.mxu0 %v400
    %432 = vmatprep.subr.mxu0 0.0
    %433 = vmatpush1.xpose.msra.mxu0 %v398
    %434 = vmatprep.subr.mxu0 0.0
    %435 = vmatpush2.xpose.msra.mxu0 0.0
    %436 = vmatprep.subr.mxu0 0.0
    %437 = vmatpush2.xpose.msra.mxu0 0.0
    %438 = vmatprep.subr.mxu0 0.0
    %439 = vmatpush2.xpose.msra.mxu0 0.0
    %440 = vmatprep.subr.mxu0 0.0
    %441 = vmatpush2.xpose.msra.mxu0 0.0
    %442 = vmatprep.subr.mxu0 0.0
    %443 = vmatpush2.xpose.msra.mxu0 0.0
    %444 = vmatprep.subr.mxu0 0.0
    %445 = vmatpush2.xpose.msra.mxu0 0.0
    %446 = vmatprep.subr.mxu0 0.0
    %447 = vmatpush2.xpose.msra.mxu0 0.0
    %448 = vmatprep.subr.mxu0 0.0
    %449 = vmatpush2.xpose.msra.mxu0 0.0
    %450 = vmatprep.subr.mxu0 0.0
    %451 = vmatpush2.xpose.msra.mxu0 0.0
    %452 = vmatprep.subr.mxu0 0.0
    %453 = vmatpush2.xpose.msra.mxu0 0.0
    %454 = vmatprep.subr.mxu0 0.0
    %455 = vmatpush2.xpose.msra.mxu0 0.0
    %456 = vmatprep.subr.mxu0 0.0
    %457 = vmatpush2.xpose.msra.mxu0 0.0
    %458 = vmatprep.subr.mxu0 0.0
    %459 = vmatpush2.xpose.msra.mxu0 0.0
    %460 = vmatprep.subr.mxu0 0.0
    %461 = vmatpush2.xpose.msra.mxu0 0.0
    %462 = vmatprep.subr.mxu0 0.0
    %463 = vmatpush2.xpose.msra.mxu0 0.0
    %464 = vmatprep.subr.mxu0 0.0
    %465 = vmatpush2.xpose.msra.mxu0 0.0
    %466 = vmatprep.mubr.f32.mxu0 0.0
    %467 = vmatmul.mubr.f32.gmra.mxu0 %v382
    %v468 = vpop.f32.mrf.mxu0
    %v469 = vadd.f32 0.0, %v468
    %v470 = vpop.f32.mrf.mxu0
    %471 = vmatprep.mubr.f32.mxu0 0.0
    %472 = vmatmul.mubr.f32.gmra.mxu0 %v384
    %v473 = vpop.f32.mrf.mxu0
    %v474 = vadd.f32 0.0, %v473
    %v475 = vpop.f32.mrf.mxu0
    %476 = vmatprep.mubr.f32.mxu0 0.0
    %477 = vmatmul.mubr.f32.gmra.mxu0 %v386
    %v478 = vpop.f32.mrf.mxu0
    %v479 = vadd.f32 0.0, %v478
    %v480 = vpop.f32.mrf.mxu0
    %481 = vmatprep.mubr.f32.mxu0 0.0
    %482 = vmatmul.mubr.f32.gmra.mxu0 %v388
    %v483 = vpop.f32.mrf.mxu0
    %v484 = vadd.f32 0.0, %v483
    %v485 = vpop.f32.mrf.mxu0
    %486 = vmatprep.mubr.f32.mxu0 0.0
    %487 = vmatmul.mubr.f32.gmra.mxu0 %v390
    %v488 = vpop.f32.mrf.mxu0
    %v489 = vadd.f32 0.0, %v488
    %v490 = vpop.f32.mrf.mxu0
    %491 = vmatprep.mubr.f32.mxu0 0.0
    %492 = vmatmul.mubr.f32.gmra.mxu0 %v392
    %v493 = vpop.f32.mrf.mxu0
    %v494 = vadd.f32 0.0, %v493
    %v495 = vpop.f32.mrf.mxu0
    %496 = vmatprep.mubr.f32.mxu0 0.0
    %497 = vmatmul.mubr.f32.gmra.mxu0 %v394
    %v498 = vpop.f32.mrf.mxu0
    %v499 = vadd.f32 0.0, %v498
    %v500 = vpop.f32.mrf.mxu0
    %501 = vmatprep.mubr.f32.mxu0 0.0
    %502 = vmatmul.mubr.f32.gmra.mxu0 %v396
    %v503 = vpop.f32.mrf.mxu0
    %v504 = vadd.f32 0.0, %v503
    %v505 = vpop.f32.mrf.mxu0
    %506 = vdwg.mxu0
    %v507 = vadd.f32 %v354, %v469
    %v508 = vadd.f32 %v357, %v474
    %v509 = vadd.f32 %v360, %v479
    %v510 = vadd.f32 %v363, %v484
    %v511 = vadd.f32 %v366, %v489
    %v512 = vadd.f32 %v369, %v494
    %v513 = vadd.f32 %v372, %v499
    %v514 = vadd.f32 %v375, %v504
    %vm515 = vcmp.gt.f32.partialorder %v507, 0.0
    %vm516 = vcmp.gt.f32.partialorder %v508, 0.0
    %vm517 = vcmp.gt.f32.partialorder %v509, 0.0
    %vm518 = vcmp.gt.f32.partialorder %v510, 0.0
    %vm519 = vcmp.gt.f32.partialorder %v511, 0.0
    %vm520 = vcmp.gt.f32.partialorder %v512, 0.0
    %vm521 = vcmp.gt.f32.partialorder %v513, 0.0
    %vm522 = vcmp.gt.f32.partialorder %v514, 0.0
    %v523 = vmul.f32 %v507, 0.2
    %v524 = vmul.f32 %v508, 0.2
    %v525 = vmul.f32 %v509, 0.2
    %v526 = vmul.f32 %v510, 0.2
    %v527 = vmul.f32 %v511, 0.2
    %v528 = vmul.f32 %v512, 0.2
    %v529 = vmul.f32 %v513, 0.2
    %v530 = vmul.f32 %v514, 0.2
    %v531 = vsel %vm515, %v507, %v523
    %v532 = vsel %vm516, %v508, %v524
    %v533 = vsel %vm517, %v509, %v525
    %v534 = vsel %vm518, %v510, %v526
    %v535 = vsel %vm519, %v511, %v527
    %v536 = vsel %vm520, %v512, %v528
    %v537 = vsel %vm521, %v513, %v529
    %v538 = vsel %vm522, %v514, %v530
    %vm539 = vcmp.gt.f32.partialorder %v42, 0.0
    %vm540 = vcmp.gt.f32.partialorder %v43, 0.0
    %vm541 = vcmp.gt.f32.partialorder %v44, 0.0
    %vm542 = vcmp.gt.f32.partialorder %v45, 0.0
    %vm543 = vcmp.gt.f32.partialorder %v46, 0.0
    %vm544 = vcmp.gt.f32.partialorder %v47, 0.0
    %vm545 = vcmp.gt.f32.partialorder %v48, 0.0
    %vm546 = vcmp.gt.f32.partialorder %v49, 0.0
    %v547 = vsel %vm539, %v531, -9e+15
    %v548 = vsel %vm540, %v532, -9e+15
    %v549 = vsel %vm541, %v533, -9e+15
    %v550 = vsel %vm542, %v534, -9e+15
    %v551 = vsel %vm543, %v535, -9e+15
    %v552 = vsel %vm544, %v536, -9e+15
    %v553 = vsel %vm545, %v537, -9e+15
    %v554 = vsel %vm546, %v538, -9e+15
    %v555 = vsel %vm56, %v547, -inf
    %556 = vmax.xlane.f32.xlu0 %v555
    %v557 = vpop.xlane.xlu0 %556
    %v558 = vsel %vm56, %v548, -inf
    %559 = vmax.xlane.f32.xlu0 %v558
    %v560 = vpop.xlane.xlu0 %559
    %v561 = vsel %vm56, %v549, -inf
    %562 = vmax.xlane.f32.xlu0 %v561
    %v563 = vpop.xlane.xlu0 %562
    %v564 = vsel %vm56, %v550, -inf
    %565 = vmax.xlane.f32.xlu0 %v564
    %v566 = vpop.xlane.xlu0 %565
    %v567 = vsel %vm56, %v551, -inf
    %568 = vmax.xlane.f32.xlu0 %v567
    %v569 = vpop.xlane.xlu0 %568
    %v570 = vsel %vm56, %v552, -inf
    %571 = vmax.xlane.f32.xlu0 %v570
    %v572 = vpop.xlane.xlu0 %571
    %v573 = vsel %vm56, %v553, -inf
    %574 = vmax.xlane.f32.xlu0 %v573
    %v575 = vpop.xlane.xlu0 %574
    %v576 = vsel %vm56, %v554, -inf
    %577 = vmax.xlane.f32.xlu0 %v576
    %v578 = vpop.xlane.xlu0 %577
    %v579 = vsub.f32 %v547, %v557
    %v580 = vsub.f32 %v548, %v560
    %v581 = vsub.f32 %v549, %v563
    %v582 = vsub.f32 %v550, %v566
    %v583 = vsub.f32 %v551, %v569
    %v584 = vsub.f32 %v552, %v572
    %v585 = vsub.f32 %v553, %v575
    %v586 = vsub.f32 %v554, %v578
    %v587 = vmul.f32 %v579, 1.442695
    %v588 = vpow.pop %v587
    %v589 = vmul.f32 %v580, 1.442695
    %v590 = vpow.pop %v589
    %v591 = vmul.f32 %v581, 1.442695
    %v592 = vpow.pop %v591
    %v593 = vmul.f32 %v582, 1.442695
    %v594 = vpow.pop %v593
    %v595 = vmul.f32 %v583, 1.442695
    %v596 = vpow.pop %v595
    %v597 = vmul.f32 %v584, 1.442695
    %v598 = vpow.pop %v597
    %v599 = vmul.f32 %v585, 1.442695
    %v600 = vpow.pop %v599
    %v601 = vmul.f32 %v586, 1.442695
    %v602 = vpow.pop %v601
    %v603 = vsel %vm56, %v588, 0.0
    %604 = vadd.xlane.f32.xlu0 %v603
    %v605 = vpop.xlane.xlu0 %604
    %v606 = vsel %vm56, %v590, 0.0
    %607 = vadd.xlane.f32.xlu0 %v606
    %v608 = vpop.xlane.xlu0 %607
    %v609 = vsel %vm56, %v592, 0.0
    %610 = vadd.xlane.f32.xlu0 %v609
    %v611 = vpop.xlane.xlu0 %610
    %v612 = vsel %vm56, %v594, 0.0
    %613 = vadd.xlane.f32.xlu0 %v612
    %v614 = vpop.xlane.xlu0 %613
    %v615 = vsel %vm56, %v596, 0.0
    %616 = vadd.xlane.f32.xlu0 %v615
    %v617 = vpop.xlane.xlu0 %616
    %v618 = vsel %vm56, %v598, 0.0
    %619 = vadd.xlane.f32.xlu0 %v618
    %v620 = vpop.xlane.xlu0 %619
    %v621 = vsel %vm56, %v600, 0.0
    %622 = vadd.xlane.f32.xlu0 %v621
    %v623 = vpop.xlane.xlu0 %622
    %v624 = vsel %vm56, %v602, 0.0
    %625 = vadd.xlane.f32.xlu0 %v624
    %v626 = vpop.xlane.xlu0 %625
    %v627 = vrcp.pop %v605
    %v628 = vmul.f32 %v588, %v627
    %v629 = vrcp.pop %v608
    %v630 = vmul.f32 %v590, %v629
    %v631 = vrcp.pop %v611
    %v632 = vmul.f32 %v592, %v631
    %v633 = vrcp.pop %v614
    %v634 = vmul.f32 %v594, %v633
    %v635 = vrcp.pop %v617
    %v636 = vmul.f32 %v596, %v635
    %v637 = vrcp.pop %v620
    %v638 = vmul.f32 %v598, %v637
    %v639 = vrcp.pop %v623
    %v640 = vmul.f32 %v600, %v639
    %v641 = vrcp.pop %v626
    %v642 = vmul.f32 %v602, %v641
    %v644 = vsel %vm56, %v628, 0
    %v647 = vsel %vm56, %v630, 0
    %v650 = vsel %vm56, %v632, 0
    %v653 = vsel %vm56, %v634, 0
    %v656 = vsel %vm56, %v636, 0
    %v659 = vsel %vm56, %v638, 0
    %v662 = vsel %vm56, %v640, 0
    %v665 = vsel %vm56, %v642, 0
    %667 = vmatprep.subr.mxu0 0.0
    %668 = vmatpush1.msra.mxu0 0.0
    %669 = vmatprep.subr.mxu0 0.0
    %670 = vmatpush1.msra.mxu0 0.0
    %671 = vmatprep.subr.mxu0 0.0
    %672 = vmatpush1.msra.mxu0 0.0
    %673 = vmatprep.subr.mxu0 0.0
    %674 = vmatpush1.msra.mxu0 0.0
    %675 = vmatprep.subr.mxu0 0.0
    %676 = vmatpush1.msra.mxu0 0.0
    %677 = vmatprep.subr.mxu0 0.0
    %678 = vmatpush1.msra.mxu0 0.0
    %679 = vmatprep.subr.mxu0 0.0
    %680 = vmatpush1.msra.mxu0 0.0
    %681 = vmatprep.subr.mxu0 0.0
    %682 = vmatpush1.msra.mxu0 0.0
    %683 = vmatprep.subr.mxu0 0.0
    %684 = vmatpush1.msra.mxu0 0.0
    %685 = vmatprep.subr.mxu0 0.0
    %686 = vmatpush1.msra.mxu0 0.0
    %687 = vmatprep.subr.mxu0 0.0
    %688 = vmatpush1.msra.mxu0 0.0
    %689 = vmatprep.subr.mxu0 0.0
    %690 = vmatpush1.msra.mxu0 0.0
    %691 = vmatprep.subr.mxu0 0.0
    %692 = vmatpush1.msra.mxu0 0.0
    %693 = vmatprep.subr.mxu0 0.0
    %694 = vmatpush1.msra.mxu0 0.0
    %695 = vmatprep.subr.mxu0 0.0
    %696 = vmatpush1.msra.mxu0 %v212
    %697 = vmatprep.subr.mxu0 0.0
    %698 = vmatpush1.msra.mxu0 %v207
    %699 = vmatprep.subr.mxu0 0.0
    %700 = vmatpush2.msra.mxu0 0.0
    %701 = vmatprep.subr.mxu0 0.0
    %702 = vmatpush2.msra.mxu0 0.0
    %703 = vmatprep.subr.mxu0 0.0
    %704 = vmatpush2.msra.mxu0 0.0
    %705 = vmatprep.subr.mxu0 0.0
    %706 = vmatpush2.msra.mxu0 0.0
    %707 = vmatprep.subr.mxu0 0.0
    %708 = vmatpush2.msra.mxu0 0.0
    %709 = vmatprep.subr.mxu0 0.0
    %710 = vmatpush2.msra.mxu0 0.0
    %711 = vmatprep.subr.mxu0 0.0
    %712 = vmatpush2.msra.mxu0 0.0
    %713 = vmatprep.subr.mxu0 0.0
    %714 = vmatpush2.msra.mxu0 0.0
    %715 = vmatprep.subr.mxu0 0.0
    %716 = vmatpush2.msra.mxu0 0.0
    %717 = vmatprep.subr.mxu0 0.0
    %718 = vmatpush2.msra.mxu0 0.0
    %719 = vmatprep.subr.mxu0 0.0
    %720 = vmatpush2.msra.mxu0 0.0
    %721 = vmatprep.subr.mxu0 0.0
    %722 = vmatpush2.msra.mxu0 0.0
    %723 = vmatprep.subr.mxu0 0.0
    %724 = vmatpush2.msra.mxu0 0.0
    %725 = vmatprep.subr.mxu0 0.0
    %726 = vmatpush2.msra.mxu0 0.0
    %727 = vmatprep.subr.mxu0 0.0
    %728 = vmatpush2.msra.mxu0 0.0
    %729 = vmatprep.subr.mxu0 0.0
    %730 = vmatpush2.msra.mxu0 0.0
    %731 = vmatprep.mubr.f32.mxu0 0.0
    %732 = vmatmul.mubr.f32.gmra.mxu0 %v644
    %v733 = vpop.f32.mrf.mxu0
    %v734 = vadd.f32 0.0, %v733
    %v735 = vpop.f32.mrf.mxu0
    %736 = vmatprep.mubr.f32.mxu0 0.0
    %737 = vmatmul.mubr.f32.gmra.mxu0 %v647
    %v738 = vpop.f32.mrf.mxu0
    %v739 = vadd.f32 0.0, %v738
    %v740 = vpop.f32.mrf.mxu0
    %741 = vmatprep.mubr.f32.mxu0 0.0
    %742 = vmatmul.mubr.f32.gmra.mxu0 %v650
    %v743 = vpop.f32.mrf.mxu0
    %v744 = vadd.f32 0.0, %v743
    %v745 = vpop.f32.mrf.mxu0
    %746 = vmatprep.mubr.f32.mxu0 0.0
    %747 = vmatmul.mubr.f32.gmra.mxu0 %v653
    %v748 = vpop.f32.mrf.mxu0
    %v749 = vadd.f32 0.0, %v748
    %v750 = vpop.f32.mrf.mxu0
    %751 = vmatprep.mubr.f32.mxu0 0.0
    %752 = vmatmul.mubr.f32.gmra.mxu0 %v656
    %v753 = vpop.f32.mrf.mxu0
    %v754 = vadd.f32 0.0, %v753
    %v755 = vpop.f32.mrf.mxu0
    %756 = vmatprep.mubr.f32.mxu0 0.0
    %757 = vmatmul.mubr.f32.gmra.mxu0 %v659
    %v758 = vpop.f32.mrf.mxu0
    %v759 = vadd.f32 0.0, %v758
    %v760 = vpop.f32.mrf.mxu0
    %761 = vmatprep.mubr.f32.mxu0 0.0
    %762 = vmatmul.mubr.f32.gmra.mxu0 %v662
    %v763 = vpop.f32.mrf.mxu0
    %v764 = vadd.f32 0.0, %v763
    %v765 = vpop.f32.mrf.mxu0
    %766 = vmatprep.mubr.f32.mxu0 0.0
    %767 = vmatmul.mubr.f32.gmra.mxu0 %v665
    %v768 = vpop.f32.mrf.mxu0
    %v769 = vadd.f32 0.0, %v768
    %v770 = vpop.f32.mrf.mxu0
    %771 = vdwg.mxu0
    %v772 = vlaneseq
    %v773 = vshrl.u32 %v772, 7
    %v774 = vsub.s32 0, %v773
    %v775 = vrot.slane %v52, %v774
    %v776 = vmul.f32 %v734, %v775
    %v777 = vmul.f32 %v739, %v775
    %v778 = vadd.f32 %v776, 0.0
    %v779 = vadd.f32 %v777, 0.0
    %v780 = vlaneseq
    %v781 = vshrl.u32 %v780, 7
    %v782 = vsub.s32 1, %v781
    %v783 = vrot.slane %v52, %v782
    %v784 = vmul.f32 %v744, %v783
    %v785 = vmul.f32 %v749, %v783
    %v786 = vadd.f32 %v778, %v784
    %v787 = vadd.f32 %v779, %v785
    %v788 = vlaneseq
    %v789 = vshrl.u32 %v788, 7
    %v790 = vsub.s32 2, %v789
    %v791 = vrot.slane %v52, %v790
    %v792 = vmul.f32 %v754, %v791
    %v793 = vmul.f32 %v759, %v791
    %v794 = vadd.f32 %v786, %v792
    %v795 = vadd.f32 %v787, %v793
    %v796 = vlaneseq
    %v797 = vshrl.u32 %v796, 7
    %v798 = vsub.s32 3, %v797
    %v799 = vrot.slane %v52, %v798
    %v800 = vmul.f32 %v764, %v799
    %v801 = vmul.f32 %v769, %v799
    %v802 = vadd.f32 %v794, %v800
    %v803 = vadd.f32 %v795, %v801
    %vm804 = vcmp.gt.f32.partialorder %v802, 0.0
    %vm805 = vcmp.gt.f32.partialorder %v803, 0.0
    %v806 = vmin.f32 %v802, 0.0
    %v807 = vmin.f32 %v803, 0.0
    %v808 = vmul.f32 %v806, 1.442695
    %v809 = vpow.pop %v808
    %v810 = vmul.f32 %v807, 1.442695
    %v811 = vpow.pop %v810
    %v812 = vsub.f32 %v809, 1.0
    %v813 = vsub.f32 %v811, 1.0
    %v814 = vsel %vm804, %v802, %v812
    %v815 = vsel %vm805, %v803, %v813
    %v816 = vlaneseq
    %v817 = vshrl.u32 %v816, 7
    %v818 = vsub.s32 0, %v817
    %v819 = vrot.slane %v53, %v818
    %v820 = vmul.f32 %v814, %v819
    %v821 = vmul.f32 %v815, %v819
    %v822 = vsel %vm229, %v820, 0.0
    %823 = vadd.xlane.f32.xlu0 %v822
    %v824 = vpop.xlane.xlu0 %823
    %v825 = vsel %vm229, %v821, 0.0
    %826 = vadd.xlane.f32.xlu0 %v825
    %v827 = vpop.xlane.xlu0 %826
    %v828 = vmax.f32 %v824, %v827
    %v829 = vrot.slane %v828, 4
    %v830 = vmax.f32 %v828, %v829
    %v831 = vrot.slane %v830, 2
    %v832 = vmax.f32 %v830, %v831
    %v833 = vrot.slane %v832, 1
    %v834 = vmax.f32 %v832, %v833
    %v835 = vsub.f32 %v824, %v834
    %v836 = vsub.f32 %v827, %v834
    %v837 = vmul.f32 %v835, 1.442695
    %v838 = vpow.pop %v837
    %v839 = vmul.f32 %v836, 1.442695
    %v840 = vpow.pop %v839
    %v841 = vmul.f32 %v814, %v838
    %v842 = vmul.f32 %v815, %v840
    %v844 = vsel %vm56, %v51, 0
    %846 = vmatprep.subr.mxu0 0.0
    %847 = vmatpush1.msra.mxu0 0.0
    %848 = vmatprep.subr.mxu0 0.0
    %849 = vmatpush1.msra.mxu0 0.0
    %850 = vmatprep.subr.mxu0 0.0
    %851 = vmatpush1.msra.mxu0 0.0
    %852 = vmatprep.subr.mxu0 0.0
    %853 = vmatpush1.msra.mxu0 0.0
    %854 = vmatprep.subr.mxu0 0.0
    %855 = vmatpush1.msra.mxu0 0.0
    %856 = vmatprep.subr.mxu0 0.0
    %857 = vmatpush1.msra.mxu0 0.0
    %858 = vmatprep.subr.mxu0 0.0
    %859 = vmatpush1.msra.mxu0 0.0
    %860 = vmatprep.subr.mxu0 0.0
    %861 = vmatpush1.msra.mxu0 0.0
    %862 = vmatprep.subr.mxu0 0.0
    %863 = vmatpush1.msra.mxu0 0.0
    %864 = vmatprep.subr.mxu0 0.0
    %865 = vmatpush1.msra.mxu0 0.0
    %866 = vmatprep.subr.mxu0 0.0
    %867 = vmatpush1.msra.mxu0 0.0
    %868 = vmatprep.subr.mxu0 0.0
    %869 = vmatpush1.msra.mxu0 0.0
    %870 = vmatprep.subr.mxu0 0.0
    %871 = vmatpush1.msra.mxu0 0.0
    %872 = vmatprep.subr.mxu0 0.0
    %873 = vmatpush1.msra.mxu0 0.0
    %874 = vmatprep.subr.mxu0 0.0
    %875 = vmatpush1.msra.mxu0 %v842
    %876 = vmatprep.subr.mxu0 0.0
    %877 = vmatpush1.msra.mxu0 %v841
    %878 = vmatprep.subr.mxu0 0.0
    %879 = vmatpush2.msra.mxu0 0.0
    %880 = vmatprep.subr.mxu0 0.0
    %881 = vmatpush2.msra.mxu0 0.0
    %882 = vmatprep.subr.mxu0 0.0
    %883 = vmatpush2.msra.mxu0 0.0
    %884 = vmatprep.subr.mxu0 0.0
    %885 = vmatpush2.msra.mxu0 0.0
    %886 = vmatprep.subr.mxu0 0.0
    %887 = vmatpush2.msra.mxu0 0.0
    %888 = vmatprep.subr.mxu0 0.0
    %889 = vmatpush2.msra.mxu0 0.0
    %890 = vmatprep.subr.mxu0 0.0
    %891 = vmatpush2.msra.mxu0 0.0
    %892 = vmatprep.subr.mxu0 0.0
    %893 = vmatpush2.msra.mxu0 0.0
    %894 = vmatprep.subr.mxu0 0.0
    %895 = vmatpush2.msra.mxu0 0.0
    %896 = vmatprep.subr.mxu0 0.0
    %897 = vmatpush2.msra.mxu0 0.0
    %898 = vmatprep.subr.mxu0 0.0
    %899 = vmatpush2.msra.mxu0 0.0
    %900 = vmatprep.subr.mxu0 0.0
    %901 = vmatpush2.msra.mxu0 0.0
    %902 = vmatprep.subr.mxu0 0.0
    %903 = vmatpush2.msra.mxu0 0.0
    %904 = vmatprep.subr.mxu0 0.0
    %905 = vmatpush2.msra.mxu0 0.0
    %906 = vmatprep.subr.mxu0 0.0
    %907 = vmatpush2.msra.mxu0 0.0
    %908 = vmatprep.subr.mxu0 0.0
    %909 = vmatpush2.msra.mxu0 0.0
    %910 = vmatprep.mubr.f32.mxu0 0.0
    %911 = vmatmul.mubr.f32.gmra.mxu0 %v844
    %v912 = vpop.f32.mrf.mxu0
    %v913 = vadd.f32 0.0, %v912
    %v914 = vpop.f32.mrf.mxu0
    %915 = vdwg.mxu0
    %916 = vmatprep.subr.mxu0 0.0
    %917 = vmatpush1.msra.mxu0 0.0
    %918 = vmatprep.subr.mxu0 0.0
    %919 = vmatpush1.msra.mxu0 0.0
    %920 = vmatprep.subr.mxu0 0.0
    %921 = vmatpush1.msra.mxu0 0.0
    %922 = vmatprep.subr.mxu0 0.0
    %923 = vmatpush1.msra.mxu0 0.0
    %924 = vmatprep.subr.mxu0 0.0
    %925 = vmatpush1.msra.mxu0 0.0
    %926 = vmatprep.subr.mxu0 0.0
    %927 = vmatpush1.msra.mxu0 0.0
    %928 = vmatprep.subr.mxu0 0.0
    %929 = vmatpush1.msra.mxu0 0.0
    %930 = vmatprep.subr.mxu0 0.0
    %931 = vmatpush1.msra.mxu0 0.0
    %932 = vmatprep.subr.mxu0 0.0
    %933 = vmatpush1.msra.mxu0 0.0
    %934 = vmatprep.subr.mxu0 0.0
    %935 = vmatpush1.msra.mxu0 0.0
    %936 = vmatprep.subr.mxu0 0.0
    %937 = vmatpush1.msra.mxu0 0.0
    %938 = vmatprep.subr.mxu0 0.0
    %939 = vmatpush1.msra.mxu0 0.0
    %940 = vmatprep.subr.mxu0 0.0
    %941 = vmatpush1.msra.mxu0 0.0
    %942 = vmatprep.subr.mxu0 0.0
    %943 = vmatpush1.msra.mxu0 0.0
    %944 = vmatprep.subr.mxu0 0.0
    %945 = vmatpush1.msra.mxu0 %v840
    %946 = vmatprep.subr.mxu0 0.0
    %947 = vmatpush1.msra.mxu0 %v838
    %948 = vmatprep.subr.mxu0 0.0
    %949 = vmatpush2.msra.mxu0 0.0
    %950 = vmatprep.subr.mxu0 0.0
    %951 = vmatpush2.msra.mxu0 0.0
    %952 = vmatprep.subr.mxu0 0.0
    %953 = vmatpush2.msra.mxu0 0.0
    %954 = vmatprep.subr.mxu0 0.0
    %955 = vmatpush2.msra.mxu0 0.0
    %956 = vmatprep.subr.mxu0 0.0
    %957 = vmatpush2.msra.mxu0 0.0
    %958 = vmatprep.subr.mxu0 0.0
    %959 = vmatpush2.msra.mxu0 0.0
    %960 = vmatprep.subr.mxu0 0.0
    %961 = vmatpush2.msra.mxu0 0.0
    %962 = vmatprep.subr.mxu0 0.0
    %963 = vmatpush2.msra.mxu0 0.0
    %964 = vmatprep.subr.mxu0 0.0
    %965 = vmatpush2.msra.mxu0 0.0
    %966 = vmatprep.subr.mxu0 0.0
    %967 = vmatpush2.msra.mxu0 0.0
    %968 = vmatprep.subr.mxu0 0.0
    %969 = vmatpush2.msra.mxu0 0.0
    %970 = vmatprep.subr.mxu0 0.0
    %971 = vmatpush2.msra.mxu0 0.0
    %972 = vmatprep.subr.mxu0 0.0
    %973 = vmatpush2.msra.mxu0 0.0
    %974 = vmatprep.subr.mxu0 0.0
    %975 = vmatpush2.msra.mxu0 0.0
    %976 = vmatprep.subr.mxu0 0.0
    %977 = vmatpush2.msra.mxu0 0.0
    %978 = vmatprep.subr.mxu0 0.0
    %979 = vmatpush2.msra.mxu0 0.0
    %980 = vmatprep.mubr.f32.mxu0 0.0
    %981 = vmatmul.mubr.f32.gmra.mxu0 %v844
    %v982 = vpop.f32.mrf.mxu0
    %v983 = vadd.f32 0.0, %v982
    %v984 = vpop.f32.mrf.mxu0
    %985 = vdwg.mxu0
    %987 = vset.pattern.permute.xlu0 0
    %988 = vperm.xlu0 %987, %v983
    %v989 = vpop.permute.xlu0 %988
    %v991 = vrcp.pop %v989
    %v992 = vmul.f32 %v913, %v991
    %v993 = vlaneseq
    %v994 = vshrl.u32 %v993, 7
    %v995 = vsub.s32 0, %v994
    %v996 = vrot.slane %v54, %v995
    %997 = vrot.lane.b32.xlu0 %v38, 88
    %v998 = vpop.permute.xlu0 %997
    %999 = vrot.lane.b32.xlu0 %v39, 88
    %v1000 = vpop.permute.xlu0 %999
    %1001 = vrot.lane.b32.xlu0 %v40, 88
    %v1002 = vpop.permute.xlu0 %1001
    %1003 = vrot.lane.b32.xlu0 %v41, 88
    %v1004 = vpop.permute.xlu0 %1003
    %v1010 = vsel %vm229, %v992, 0
    %1012 = vmatprep.subr.mxu0 0.0
    %1013 = vmatpush1.msra.mxu0 0.0
    %1014 = vmatprep.subr.mxu0 0.0
    %1015 = vmatpush1.msra.mxu0 0.0
    %1016 = vmatprep.subr.mxu0 0.0
    %1017 = vmatpush1.msra.mxu0 0.0
    %1018 = vmatprep.subr.mxu0 0.0
    %1019 = vmatpush1.msra.mxu0 0.0
    %1020 = vmatprep.subr.mxu0 0.0
    %1021 = vmatpush1.msra.mxu0 0.0
    %1022 = vmatprep.subr.mxu0 0.0
    %1023 = vmatpush1.msra.mxu0 0.0
    %1024 = vmatprep.subr.mxu0 0.0
    %1025 = vmatpush1.msra.mxu0 0.0
    %1026 = vmatprep.subr.mxu0 0.0
    %1027 = vmatpush1.msra.mxu0 0.0
    %1028 = vmatprep.subr.mxu0 0.0
    %1029 = vmatpush1.msra.mxu0 0.0
    %1030 = vmatprep.subr.mxu0 0.0
    %1031 = vmatpush1.msra.mxu0 0.0
    %1032 = vmatprep.subr.mxu0 0.0
    %1033 = vmatpush1.msra.mxu0 0.0
    %1034 = vmatprep.subr.mxu0 0.0
    %1035 = vmatpush1.msra.mxu0 0.0
    %1036 = vmatprep.subr.mxu0 0.0
    %1037 = vmatpush1.msra.mxu0 %v1004
    %1038 = vmatprep.subr.mxu0 0.0
    %1039 = vmatpush1.msra.mxu0 %v1002
    %1040 = vmatprep.subr.mxu0 0.0
    %1041 = vmatpush1.msra.mxu0 %v1000
    %1042 = vmatprep.subr.mxu0 0.0
    %1043 = vmatpush1.msra.mxu0 %v998
    %1044 = vmatprep.subr.mxu0 0.0
    %1045 = vmatpush2.msra.mxu0 0.0
    %1046 = vmatprep.subr.mxu0 0.0
    %1047 = vmatpush2.msra.mxu0 0.0
    %1048 = vmatprep.subr.mxu0 0.0
    %1049 = vmatpush2.msra.mxu0 0.0
    %1050 = vmatprep.subr.mxu0 0.0
    %1051 = vmatpush2.msra.mxu0 0.0
    %1052 = vmatprep.subr.mxu0 0.0
    %1053 = vmatpush2.msra.mxu0 0.0
    %1054 = vmatprep.subr.mxu0 0.0
    %1055 = vmatpush2.msra.mxu0 0.0
    %1056 = vmatprep.subr.mxu0 0.0
    %1057 = vmatpush2.msra.mxu0 0.0
    %1058 = vmatprep.subr.mxu0 0.0
    %1059 = vmatpush2.msra.mxu0 0.0
    %1060 = vmatprep.subr.mxu0 0.0
    %1061 = vmatpush2.msra.mxu0 0.0
    %1062 = vmatprep.subr.mxu0 0.0
    %1063 = vmatpush2.msra.mxu0 0.0
    %1064 = vmatprep.subr.mxu0 0.0
    %1065 = vmatpush2.msra.mxu0 0.0
    %1066 = vmatprep.subr.mxu0 0.0
    %1067 = vmatpush2.msra.mxu0 0.0
    %1068 = vmatprep.subr.mxu0 0.0
    %1069 = vmatpush2.msra.mxu0 0.0
    %1070 = vmatprep.subr.mxu0 0.0
    %1071 = vmatpush2.msra.mxu0 0.0
    %1072 = vmatprep.subr.mxu0 0.0
    %1073 = vmatpush2.msra.mxu0 0.0
    %1074 = vmatprep.subr.mxu0 0.0
    %1075 = vmatpush2.msra.mxu0 0.0
    %1076 = vmatprep.mubr.f32.mxu0 0.0
    %1077 = vmatmul.mubr.f32.gmra.mxu0 %v1010
    %v1078 = vpop.f32.mrf.mxu0
    %v1079 = vadd.f32 %v996, %v1078
    %v1080 = vpop.f32.mrf.mxu0
    %1081 = vdwg.mxu0
    %vm1082 = vcmask 123904
    %1083 = vst.msk [vmem:[#allocation7] sm:$0x3] %vm1082, %v1079
    // Predicated region
    $region18: #{fgsbir_gat_forward.1} parent=1 // pred_check
      _
    $region19: #{fgsbir_gat_forward.1} parent=1 // pred_check_branch
      %1085 = sbr.rel (0) target = $region21
    $region20: #{fgsbir_gat_forward.1} parent=1 // pred_region
      %s1087 = ssub.s32 32, 32
      %1088 = vsyncadd [#allocation4], %s1087
      %s1090 = sshll.u32 [#allocation7], 4
      %s1091 = int_to_ptr.vmem [resolvable:$true] %s1090
      %1093 = dma.vmem_to_hbm [thread:$0]  %s1091, 32, %s2, [#allocation4]
    $region21: #{fgsbir_gat_forward.1} parent=1 // pred_fallthru
      _
    // Predicated region
    $region22: #{fgsbir_gat_forward.1} parent=1 // pred_check
      _
    $region23: #{fgsbir_gat_forward.1} parent=1 // pred_check_branch
      %1095 = sbr.rel (0) target = $region25
    $region24: #{fgsbir_gat_forward.1} parent=1 // pred_region
      %1096 = dma.done [#allocation4], 32
    $region25: #{fgsbir_gat_forward.1} parent=1 // pred_fallthru
      _
    %1097 = vsyncpa [#allocation3], 1
    %1098 = vsyncpa [#allocation6], 1
    %1099 = vsyncpa [#allocation4], 1

</llo_original>
